<compile_context>
chip_gen: v7x
topology: tpu7x:2x2x1
jax: 0.10.0
libtpu: 0.0.40
codegen_flags: <defaults>
</compile_context>

<pallas_src>
import jax
import jax.numpy as jnp
from jax.experimental import pallas as pl
from jax.experimental.pallas import tpu as pltpu


def _make_mlp_kernel(num_linear_layers):
    """Fused MLP kernel: (Linear -> ReLU)*(L-1) -> Linear, lane-dense layout.

    Kernel args: x_ref [in_dim, tile], then interleaved (w_i [out_i, in_i],
    b_i [out_i, 1]) refs, then o_ref [out_dim, tile].
    """

    def kernel(x_ref, *refs):
        o_ref = refs[-1]
        wb_refs = refs[:-1]
        h = x_ref[...]  # f32 [in_dim, tile]
        for i in range(num_linear_layers):
            w = wb_refs[2 * i][...]        # [out_i, in_i]
            b = wb_refs[2 * i + 1][...]    # [out_i, 1] -> broadcasts over lanes
            h = jnp.dot(w, h, preferred_element_type=jnp.float32) + b
            if i < num_linear_layers - 1:
                h = jnp.maximum(h, 0.0)    # ReLU
        o_ref[...] = h.astype(o_ref.dtype)

    return kernel


def _round_up(a, m):
    return ((a + m - 1) // m) * m


def flow_gnn_bc_fc_block(x, params, *, col_tile=512):
    """Applies the FC block.

    x:      [N, in_dim] float32  (PyTorch layout: features on last dim)
    params: list of (w, b) with w: [in_i, out_i], b: [1, out_i]  (torch-like)
    returns [N, out_dim]
    """
    n, in_dim = x.shape
    out_dim = params[-1][0].shape[1]
    num_linear = len(params)

    # Lane-dense layout: features on the sublane axis, samples on the lane axis.
    x_t = x.T  # [in_dim, n]

    # Pick a lane tile (multiple of 128) and pad the sample axis to it.
    n_128 = _round_up(n, 128)
    if n_128 <= col_tile:
        tile = n_128          # tiny problem: single grid step
        n_pad = n_128
    else:
        tile = col_tile
        n_pad = _round_up(n, tile)
    if n_pad != n:
        x_t = jnp.pad(x_t, ((0, 0), (0, n_pad - n)))

    grid = (n_pad // tile,)
    kernel = _make_mlp_kernel(num_linear)

    # x tiled over the lane axis; weights/biases are small full-array blocks
    # kept resident in VMEM (index_map always (0, 0)).
    in_specs = [pl.BlockSpec((in_dim, tile), lambda i: (0, i))]
    flat_wb = []
    for (w, b) in params:
        w_t = jnp.asarray(w).T            # [out_i, in_i]
        b_t = jnp.asarray(b).reshape(-1, 1)  # [out_i, 1]
        in_specs.append(pl.BlockSpec(w_t.shape, lambda i: (0, 0)))
        in_specs.append(pl.BlockSpec(b_t.shape, lambda i: (0, 0)))
        flat_wb.extend([w_t, b_t])

    out_spec = pl.BlockSpec((out_dim, tile), lambda i: (0, i))

    y_t = pl.pallas_call(
        kernel,
        out_shape=jax.ShapeDtypeStruct((out_dim, n_pad), x.dtype),
        grid_spec=pltpu.PrefetchScalarGridSpec(
            num_scalar_prefetch=0,
            grid=grid,
            in_specs=in_specs,
            out_specs=out_spec,
        ),
        compiler_params=pltpu.CompilerParams(
            dimension_semantics=("parallel",)),
    )(x_t, *flat_wb)

    # Drop lane padding and return in the original [N, out_dim] layout.
    return y_t[:, :n].T


def init_params(key, in_dim, hidden_dim, out_dim, layers_num):
    """Deterministic init mirroring the module's layer structure."""
    dims = [in_dim] + [hidden_dim] * (layers_num - 1) + [out_dim]
    params = []
    for i in range(layers_num):
        key, kw, kb = jax.random.split(key, 3)
        fan_in = dims[i]
        bound = 1.0 / jnp.sqrt(fan_in)
        w = jax.random.uniform(kw, (dims[i], dims[i + 1]),
                               minval=-bound, maxval=bound,
                               dtype=jnp.float32)
        b = jax.random.uniform(kb, (1, dims[i + 1]),
                               minval=-bound, maxval=bound,
                               dtype=jnp.float32)
        params.append((w, b))
    return params


def reference_forward(x, params):
    h = x
    for i, (w, b) in enumerate(params):
        h = h @ w + b
        if i < len(params) - 1:
            h = jnp.maximum(h, 0.0)
    return h


if __name__ == "__main__":
    # Shapes consistent with the module: hidden_dim=32, layers_num=2, out_dim=8.
    IN_DIM, HIDDEN, OUT_DIM, LAYERS = 16, 32, 8, 2

    key = jax.random.PRNGKey(0)
    key, kp = jax.random.split(key)
    params = init_params(kp, IN_DIM, HIDDEN, OUT_DIM, LAYERS)

    ok = True
    # Case 1: tiny N -> single grid step, lane-padded to 128.
    # Case 2: ragged N -> multi-step grid with lane padding (exercises cdiv/pad path).
    for N in (16, 777):
        key, kx = jax.random.split(key)
        x = jax.random.normal(kx, (N, IN_DIM), dtype=jnp.float32)

        y = flow_gnn_bc_fc_block(x, params)
        y = jax.block_until_ready(y)

        y_ref = reference_forward(x, params)
        ok = ok and (y.shape == (N, OUT_DIM))
        ok = ok and bool(jnp.allclose(y, y_ref, atol=1e-5, rtol=1e-5))

    assert ok
    print("KERNEL_OK")
</pallas_src>

<mosaic_0001>
module attributes {stable_mosaic.version = 11 : i64} {
  func.func @kernel(%arg0: i32, %arg1: memref<16x128xf32, #tpu.memory_space<vmem>>, %arg2: memref<32x16xf32, #tpu.memory_space<vmem>>, %arg3: memref<32x1xf32, #tpu.memory_space<vmem>>, %arg4: memref<8x32xf32, #tpu.memory_space<vmem>>, %arg5: memref<8x1xf32, #tpu.memory_space<vmem>>, %arg6: memref<8x128xf32, #tpu.memory_space<vmem>>) attributes {dimension_semantics = [#tpu.dimension_semantics<parallel>], iteration_bounds = array<i64: 1>, scalar_prefetch = 0 : i64, scratch_operands = 0 : i64, tpu.core_type = #tpu.core_type<tc>, window_params = [{transform_indices = @transform_0, window_bounds = array<i64: 16, 128>}, {pipeline_mode = #tpu.pipeline_mode<synchronous>, transform_indices = @transform_1, window_bounds = array<i64: 32, 16>}, {pipeline_mode = #tpu.pipeline_mode<synchronous>, transform_indices = @transform_2, window_bounds = array<i64: 32, 1>}, {pipeline_mode = #tpu.pipeline_mode<synchronous>, transform_indices = @transform_3, window_bounds = array<i64: 8, 32>}, {pipeline_mode = #tpu.pipeline_mode<synchronous>, transform_indices = @transform_4, window_bounds = array<i64: 8, 1>}, {transform_indices = @transform_5, window_bounds = array<i64: 8, 128>}]} {
    %c0 = arith.constant 0 : index
    %c0_0 = arith.constant 0 : index
    %0 = vector.load %arg1[%c0, %c0_0] : memref<16x128xf32, #tpu.memory_space<vmem>>, vector<16x128xf32>
    %c0_1 = arith.constant 0 : index
    %c0_2 = arith.constant 0 : index
    %1 = vector.load %arg2[%c0_1, %c0_2] : memref<32x16xf32, #tpu.memory_space<vmem>>, vector<32x16xf32>
    %c0_3 = arith.constant 0 : index
    %c0_4 = arith.constant 0 : index
    %2 = vector.load %arg3[%c0_3, %c0_4] : memref<32x1xf32, #tpu.memory_space<vmem>>, vector<32x1xf32>
    %cst = arith.constant dense<0.000000e+00> : vector<32x128xf32>
    %3 = tpu.matmul %1, %0, %cst {dimension_numbers = #tpu.dot_dimension_numbers<[1], [0], [0], [1], [0, 0, 1, 1], [], []>} : vector<32x16xf32>, vector<16x128xf32>, vector<32x128xf32> -> vector<32x128xf32>
    %4 = vector.broadcast %2 : vector<32x1xf32> to vector<32x128xf32>
    %5 = arith.addf %3, %4 : vector<32x128xf32>
    %cst_5 = arith.constant 0.000000e+00 : f32
    %6 = vector.broadcast %cst_5 : f32 to vector<32x128xf32>
    %7 = arith.maximumf %5, %6 : vector<32x128xf32>
    %c0_6 = arith.constant 0 : index
    %c0_7 = arith.constant 0 : index
    %8 = vector.load %arg4[%c0_6, %c0_7] : memref<8x32xf32, #tpu.memory_space<vmem>>, vector<8x32xf32>
    %c0_8 = arith.constant 0 : index
    %c0_9 = arith.constant 0 : index
    %9 = vector.load %arg5[%c0_8, %c0_9] : memref<8x1xf32, #tpu.memory_space<vmem>>, vector<8x1xf32>
    %cst_10 = arith.constant dense<0.000000e+00> : vector<8x128xf32>
    %10 = tpu.matmul %8, %7, %cst_10 {dimension_numbers = #tpu.dot_dimension_numbers<[1], [0], [0], [1], [0, 0, 1, 1], [], []>} : vector<8x32xf32>, vector<32x128xf32>, vector<8x128xf32> -> vector<8x128xf32>
    %11 = vector.broadcast %9 : vector<8x1xf32> to vector<8x128xf32>
    %12 = arith.addf %10, %11 : vector<8x128xf32>
    %c0_11 = arith.constant 0 : index
    %c0_12 = arith.constant 0 : index
    %13 = vector.load %arg6[%c0_11, %c0_12] : memref<8x128xf32, #tpu.memory_space<vmem>>, vector<8x128xf32>
    tpu.vector_store %arg6[%c0_11, %c0_12], %12 {strides = array<i32>} : memref<8x128xf32, #tpu.memory_space<vmem>>, vector<8x128xf32>,
    return
  }
  func.func @transform_0(%arg0: i32) -> (i32, i32) {
    %c0_i32 = arith.constant 0 : i32
    %c0_i32_0 = arith.constant 0 : i32
    return %c0_i32, %arg0 : i32, i32
  }
  func.func @transform_1(%arg0: i32) -> (i32, i32) {
    %c0_i32 = arith.constant 0 : i32
    %c0_i32_0 = arith.constant 0 : i32
    %c0_i32_1 = arith.constant 0 : i32
    return %c0_i32, %c0_i32_0 : i32, i32
  }
  func.func @transform_2(%arg0: i32) -> (i32, i32) {
    %c0_i32 = arith.constant 0 : i32
    %c0_i32_0 = arith.constant 0 : i32
    %c0_i32_1 = arith.constant 0 : i32
    return %c0_i32, %c0_i32_0 : i32, i32
  }
  func.func @transform_3(%arg0: i32) -> (i32, i32) {
    %c0_i32 = arith.constant 0 : i32
    %c0_i32_0 = arith.constant 0 : i32
    %c0_i32_1 = arith.constant 0 : i32
    return %c0_i32, %c0_i32_0 : i32, i32
  }
  func.func @transform_4(%arg0: i32) -> (i32, i32) {
    %c0_i32 = arith.constant 0 : i32
    %c0_i32_0 = arith.constant 0 : i32
    %c0_i32_1 = arith.constant 0 : i32
    return %c0_i32, %c0_i32_0 : i32, i32
  }
  func.func @transform_5(%arg0: i32) -> (i32, i32) {
    %c0_i32 = arith.constant 0 : i32
    %c0_i32_0 = arith.constant 0 : i32
    return %c0_i32, %arg0 : i32, i32
  }
}

</mosaic_0001>

<llo_original>
// kernel: tpu_custom_call.1
$region0: #{tpu_custom_call.1}
  #allocation0 [shape = 'u32[]', space=smem, size = 0x4, offset = 0x4, fixed_abs, tag = 'smem constant byte address 0x4 - core index']
  #allocation1 [shape = 'u32[144,128]{1,0:T(1,128)}', space=vmem, size = 0x12000, scoped, tag = 'internal scratch']
  %s0 = inlined_call_operand.vmem [shape: f32[16,128], index: 0, kind: input, shape index: {}]
  %s1 = inlined_call_operand.vmem [shape: f32[32,16], index: 1, kind: input, shape index: {}]
  %s2 = inlined_call_operand.vmem [shape: f32[32,1], index: 2, kind: input, shape index: {}]
  %s3 = inlined_call_operand.vmem [shape: f32[8,32], index: 3, kind: input, shape index: {}]
  %s4 = inlined_call_operand.vmem [shape: f32[8,1], index: 4, kind: input, shape index: {}]
  %s5 = inlined_call_operand.hbm [shape: f32[8,128], index: 5, kind: output, shape index: {}]
  %s6 = sld [smem:[#allocation0]]
  $region30: #{tpu_custom_call.1} parent=0
    _
  %s8 = ssub.s32 1, %s6
  %s9 = scalar_select 0, %s8, %s6
  $region1: #{tpu_custom_call.1} parent=0
    #allocation2 [shape = 'u8[4096]{0}', space=vmem, size = 0x1000, scoped, tag = 'output window, operand 0, single buffered']
    #allocation3 [shape = 's32[1]{0}', space=sflag, size = 0x4, scoped, tag = 'scoped memory for tpu_custom_call.1']
    %10 = vsyncpa [#allocation3], 0
    // Predicated region
    $region2: #{tpu_custom_call.1} parent=1 // pred_check
      _
    $region3: #{tpu_custom_call.1} parent=1 // pred_check_branch
      %12 = sbr.rel (0) target = $region5
    $region4: #{tpu_custom_call.1} parent=1 // pred_region
      _
    $region5: #{tpu_custom_call.1} parent=1 // pred_fallthru
      _
    // Predicated region
    $region6: #{tpu_custom_call.1} parent=1 // pred_check
      _
    $region7: #{tpu_custom_call.1} parent=1 // pred_check_branch
      %14 = sbr.rel (0) target = $region9
    $region8: #{tpu_custom_call.1} parent=1 // pred_region
      _
    $region9: #{tpu_custom_call.1} parent=1 // pred_fallthru
      _
    // Predicated region
    $region10: #{tpu_custom_call.1} parent=1 // pred_check
      _
    $region11: #{tpu_custom_call.1} parent=1 // pred_check_branch
      %16 = sbr.rel (0) target = $region13
    $region12: #{tpu_custom_call.1} parent=1 // pred_region
      _
    $region13: #{tpu_custom_call.1} parent=1 // pred_fallthru
      _
    // Predicated region
    $region14: #{tpu_custom_call.1} parent=1 // pred_check
      _
    $region15: #{tpu_custom_call.1} parent=1 // pred_check_branch
      %18 = sbr.rel (0) target = $region17
    $region16: #{tpu_custom_call.1} parent=1 // pred_region
      _
    $region17: #{tpu_custom_call.1} parent=1 // pred_fallthru
      _
    // Predicated region
    $region18: #{tpu_custom_call.1} parent=1 // pred_check
      _
    $region19: #{tpu_custom_call.1} parent=1 // pred_check_branch
      %20 = sbr.rel (0) target = $region21
    $region20: #{tpu_custom_call.1} parent=1 // pred_region
      _
    $region21: #{tpu_custom_call.1} parent=1 // pred_fallthru
      _
    %v21 = vld [vmem:[%s0] sm:$0xff]
    %v22 = vld [vmem:[%s0 + $0x8] sm:$0xff]
    %v23 = vld [vmem:[%s1] sm:$0xff]
    %v24 = vld [vmem:[%s1 + $0x8] sm:$0xff]
    %v25 = vld [vmem:[%s1 + $0x10] sm:$0xff]
    %v26 = vld [vmem:[%s1 + $0x18] sm:$0xff]
    %v27 = vld [vmem:[%s2] sm:$0xff]
    %v28 = vld [vmem:[%s2 + $0x8] sm:$0xff]
    %v29 = vld [vmem:[%s2 + $0x10] sm:$0xff]
    %v30 = vld [vmem:[%s2 + $0x18] sm:$0xff]
    %32 = vset.pattern.permute.xlu0 0
    %33 = vperm.xlu0 %32, %v27
    %v34 = vpop.permute.xlu0 %33
    %37 = vset.pattern.permute.xlu0 0
    %38 = vperm.xlu0 %37, %v28
    %v39 = vpop.permute.xlu0 %38
    %42 = vset.pattern.permute.xlu0 0
    %43 = vperm.xlu0 %42, %v29
    %v44 = vpop.permute.xlu0 %43
    %47 = vset.pattern.permute.xlu0 0
    %48 = vperm.xlu0 %47, %v30
    %v49 = vpop.permute.xlu0 %48
    %vm51 = vcmask 130048
    %v53 = vsel %vm51, %v23, 0
    %v56 = vsel %vm51, %v24, 0
    %v59 = vsel %vm51, %v25, 0
    %v62 = vsel %vm51, %v26, 0
    %64 = vmatprep.subr.mxu0 0.0
    %65 = vmatpush1.msra.mxu0 %v21
    %66 = vmatprep.subr.mxu0 0.0
    %67 = vmatpush1.msra.mxu0 %v22
    %68 = vmatprep.subr.mxu0 0.0
    %69 = vmatpush1.msra.mxu0 0.0
    %70 = vmatprep.subr.mxu0 0.0
    %71 = vmatpush1.msra.mxu0 0.0
    %72 = vmatprep.subr.mxu0 0.0
    %73 = vmatpush1.msra.mxu0 0.0
    %74 = vmatprep.subr.mxu0 0.0
    %75 = vmatpush1.msra.mxu0 0.0
    %76 = vmatprep.subr.mxu0 0.0
    %77 = vmatpush1.msra.mxu0 0.0
    %78 = vmatprep.subr.mxu0 0.0
    %79 = vmatpush1.msra.mxu0 0.0
    %80 = vmatprep.subr.mxu0 0.0
    %81 = vmatpush1.msra.mxu0 0.0
    %82 = vmatprep.subr.mxu0 0.0
    %83 = vmatpush1.msra.mxu0 0.0
    %84 = vmatprep.subr.mxu0 0.0
    %85 = vmatpush1.msra.mxu0 0.0
    %86 = vmatprep.subr.mxu0 0.0
    %87 = vmatpush1.msra.mxu0 0.0
    %88 = vmatprep.subr.mxu0 0.0
    %89 = vmatpush1.msra.mxu0 0.0
    %90 = vmatprep.subr.mxu0 0.0
    %91 = vmatpush1.msra.mxu0 0.0
    %92 = vmatprep.subr.mxu0 0.0
    %93 = vmatpush1.msra.mxu0 0.0
    %94 = vmatprep.subr.mxu0 0.0
    %95 = vmatpush1.msra.mxu0 0.0
    %96 = vmatprep.subr.mxu0 0.0
    %97 = vmatpush1.msra.mxu0 0.0
    %98 = vmatprep.subr.mxu0 0.0
    %99 = vmatpush1.msra.mxu0 0.0
    %100 = vmatprep.subr.mxu0 0.0
    %101 = vmatpush1.msra.mxu0 0.0
    %102 = vmatprep.subr.mxu0 0.0
    %103 = vmatpush1.msra.mxu0 0.0
    %104 = vmatprep.subr.mxu0 0.0
    %105 = vmatpush1.msra.mxu0 0.0
    %106 = vmatprep.subr.mxu0 0.0
    %107 = vmatpush1.msra.mxu0 0.0
    %108 = vmatprep.subr.mxu0 0.0
    %109 = vmatpush1.msra.mxu0 0.0
    %110 = vmatprep.subr.mxu0 0.0
    %111 = vmatpush1.msra.mxu0 0.0
    %112 = vmatprep.subr.mxu0 0.0
    %113 = vmatpush1.msra.mxu0 0.0
    %114 = vmatprep.subr.mxu0 0.0
    %115 = vmatpush1.msra.mxu0 0.0
    %116 = vmatprep.subr.mxu0 0.0
    %117 = vmatpush1.msra.mxu0 0.0
    %118 = vmatprep.subr.mxu0 0.0
    %119 = vmatpush1.msra.mxu0 0.0
    %120 = vmatprep.subr.mxu0 0.0
    %121 = vmatpush1.msra.mxu0 0.0
    %122 = vmatprep.subr.mxu0 0.0
    %123 = vmatpush1.msra.mxu0 0.0
    %124 = vmatprep.subr.mxu0 0.0
    %125 = vmatpush1.msra.mxu0 0.0
    %126 = vmatprep.subr.mxu0 0.0
    %127 = vmatpush1.msra.mxu0 0.0
    %128 = vmatprep.mubr.f32.mxu0 0.0
    %129 = vmatmul.mubr.f32.gmra.mrb[0].mxu0 %v53
    %v130 = vpop.f32.mrb[0].mxu0
    %v131 = vadd.f32 %v34, %v130
    %v132 = vpop.f32.mrb[0].mxu0
    %133 = vmatprep.mubr.f32.mxu0 0.0
    %134 = vmatmul.mubr.f32.gmra.mrb[0].mxu0 %v56
    %v135 = vpop.f32.mrb[0].mxu0
    %v136 = vadd.f32 %v39, %v135
    %v137 = vpop.f32.mrb[0].mxu0
    %138 = vmatprep.mubr.f32.mxu0 0.0
    %139 = vmatmul.mubr.f32.gmra.mrb[0].mxu0 %v59
    %v140 = vpop.f32.mrb[0].mxu0
    %v141 = vadd.f32 %v44, %v140
    %v142 = vpop.f32.mrb[0].mxu0
    %143 = vmatprep.mubr.f32.mxu0 0.0
    %144 = vmatmul.mubr.f32.gmra.mrb[0].mxu0 %v62
    %v145 = vpop.f32.mrb[0].mxu0
    %v146 = vadd.f32 %v49, %v145
    %v147 = vpop.f32.mrb[0].mxu0
    %148 = vdwg.mxu0
    %v149 = vmax.f32 %v131, 0.0
    %v150 = vmax.f32 %v136, 0.0
    %v151 = vmax.f32 %v141, 0.0
    %v152 = vmax.f32 %v146, 0.0
    %v153 = vld [vmem:[%s3] sm:$0xff]
    %v154 = vld [vmem:[%s4] sm:$0xff]
    %156 = vset.pattern.permute.xlu0 0
    %157 = vperm.xlu0 %156, %v154
    %v158 = vpop.permute.xlu0 %157
    %vm160 = vcmask 261120
    %v162 = vsel %vm160, %v153, 0
    %164 = vmatprep.subr.mxu0 0.0
    %165 = vmatpush1.msra.mxu0 %v149
    %166 = vmatprep.subr.mxu0 0.0
    %167 = vmatpush1.msra.mxu0 %v150
    %168 = vmatprep.subr.mxu0 0.0
    %169 = vmatpush1.msra.mxu0 %v151
    %170 = vmatprep.subr.mxu0 0.0
    %171 = vmatpush1.msra.mxu0 %v152
    %172 = vmatprep.subr.mxu0 0.0
    %173 = vmatpush1.msra.mxu0 0.0
    %174 = vmatprep.subr.mxu0 0.0
    %175 = vmatpush1.msra.mxu0 0.0
    %176 = vmatprep.subr.mxu0 0.0
    %177 = vmatpush1.msra.mxu0 0.0
    %178 = vmatprep.subr.mxu0 0.0
    %179 = vmatpush1.msra.mxu0 0.0
    %180 = vmatprep.subr.mxu0 0.0
    %181 = vmatpush1.msra.mxu0 0.0
    %182 = vmatprep.subr.mxu0 0.0
    %183 = vmatpush1.msra.mxu0 0.0
    %184 = vmatprep.subr.mxu0 0.0
    %185 = vmatpush1.msra.mxu0 0.0
    %186 = vmatprep.subr.mxu0 0.0
    %187 = vmatpush1.msra.mxu0 0.0
    %188 = vmatprep.subr.mxu0 0.0
    %189 = vmatpush1.msra.mxu0 0.0
    %190 = vmatprep.subr.mxu0 0.0
    %191 = vmatpush1.msra.mxu0 0.0
    %192 = vmatprep.subr.mxu0 0.0
    %193 = vmatpush1.msra.mxu0 0.0
    %194 = vmatprep.subr.mxu0 0.0
    %195 = vmatpush1.msra.mxu0 0.0
    %196 = vmatprep.subr.mxu0 0.0
    %197 = vmatpush1.msra.mxu0 0.0
    %198 = vmatprep.subr.mxu0 0.0
    %199 = vmatpush1.msra.mxu0 0.0
    %200 = vmatprep.subr.mxu0 0.0
    %201 = vmatpush1.msra.mxu0 0.0
    %202 = vmatprep.subr.mxu0 0.0
    %203 = vmatpush1.msra.mxu0 0.0
    %204 = vmatprep.subr.mxu0 0.0
    %205 = vmatpush1.msra.mxu0 0.0
    %206 = vmatprep.subr.mxu0 0.0
    %207 = vmatpush1.msra.mxu0 0.0
    %208 = vmatprep.subr.mxu0 0.0
    %209 = vmatpush1.msra.mxu0 0.0
    %210 = vmatprep.subr.mxu0 0.0
    %211 = vmatpush1.msra.mxu0 0.0
    %212 = vmatprep.subr.mxu0 0.0
    %213 = vmatpush1.msra.mxu0 0.0
    %214 = vmatprep.subr.mxu0 0.0
    %215 = vmatpush1.msra.mxu0 0.0
    %216 = vmatprep.subr.mxu0 0.0
    %217 = vmatpush1.msra.mxu0 0.0
    %218 = vmatprep.subr.mxu0 0.0
    %219 = vmatpush1.msra.mxu0 0.0
    %220 = vmatprep.subr.mxu0 0.0
    %221 = vmatpush1.msra.mxu0 0.0
    %222 = vmatprep.subr.mxu0 0.0
    %223 = vmatpush1.msra.mxu0 0.0
    %224 = vmatprep.subr.mxu0 0.0
    %225 = vmatpush1.msra.mxu0 0.0
    %226 = vmatprep.subr.mxu0 0.0
    %227 = vmatpush1.msra.mxu0 0.0
    %228 = vmatprep.mubr.f32.mxu0 0.0
    %229 = vmatmul.mubr.f32.gmra.mrb[0].mxu0 %v162
    %v230 = vpop.f32.mrb[0].mxu0
    %v231 = vadd.f32 %v158, %v230
    %v232 = vpop.f32.mrb[0].mxu0
    %233 = vdwg.mxu0
    %234 = vst [vmem:[#allocation2] sm:$0xff] %v231
    // Predicated region
    $region22: #{tpu_custom_call.1} parent=1 // pred_check
      _
    $region23: #{tpu_custom_call.1} parent=1 // pred_check_branch
      %236 = sbr.rel (0) target = $region25
    $region24: #{tpu_custom_call.1} parent=1 // pred_region
      %s238 = ssub.s32 128, 128
      %239 = vsyncadd [#allocation3], %s238
      %s241 = sshll.u32 [#allocation2], 4
      %s242 = int_to_ptr.vmem [resolvable:$true] %s241
      %244 = dma.vmem_to_hbm [thread:$0]  %s242, 128, %s5, [#allocation3]
    $region25: #{tpu_custom_call.1} parent=1 // pred_fallthru
      _
    // Predicated region
    $region26: #{tpu_custom_call.1} parent=1 // pred_check
      _
    $region27: #{tpu_custom_call.1} parent=1 // pred_check_branch
      %246 = sbr.rel (0) target = $region29
    $region28: #{tpu_custom_call.1} parent=1 // pred_region
      %247 = dma.done [#allocation3], 128
    $region29: #{tpu_custom_call.1} parent=1 // pred_fallthru
      _
    %248 = vsyncpa [#allocation3], 1

</llo_original>
